<compile_context>
chip_gen: v6e
topology: v6e:2x2x1
jax: 0.10.0
libtpu: 0.0.40
codegen_flags: <defaults>
</compile_context>

<pallas_src>
import jax
import jax.numpy as jnp
from jax import lax
from jax.experimental import pallas as pl
from jax.experimental.pallas import tpu as pltpu


# ---------------- rotation matrix construction (matches torch reference) ----------------
def rotate_x_matrix(angle):
    c, s = jnp.cos(angle), jnp.sin(angle)
    m = jnp.array([[1.0, 0.0, 0.0],
                   [0.0, c, -s],
                   [0.0, s, c]], dtype=jnp.float32)
    return m.T


def rotate_y_matrix(angle):
    c, s = jnp.cos(angle), jnp.sin(angle)
    m = jnp.array([[c, 0.0, s],
                   [0.0, 1.0, 0.0],
                   [-s, 0.0, c]], dtype=jnp.float32)
    return m.T


def rotate_z_matrix(angle):
    c, s = jnp.cos(angle), jnp.sin(angle)
    m = jnp.array([[c, -s, 0.0],
                   [s, c, 0.0],
                   [0.0, 0.0, 1.0]], dtype=jnp.float32)
    return m.T


def rotation_matrix(angle_x, angle_y, angle_z):
    z_rotation = rotate_z_matrix(jnp.float32(angle_z))
    y_rotation = rotate_y_matrix(jnp.float32(angle_y))
    x_rotation = rotate_x_matrix(jnp.float32(angle_x))
    return z_rotation @ y_rotation @ x_rotation  # (3, 3)


# ---------------- Pallas kernel ----------------
def rotate_kernel(rot_ref, pts_ref, out_ref):
    # rot_ref: (9,) f32 in SMEM — row-major 3x3 rotation matrix R (out = p @ R).
    # pts_ref / out_ref: (rb, cb) f32 VMEM tiles of the flat interleaved
    #   x0 y0 z0 x1 y1 z1 ... stream. cb and every block's start column are
    #   multiples of 3, so lane c holds component (c % 3) of point (c // 3),
    #   and a point never spans a row or tile boundary.
    v = pts_ref[...]
    rb, cb = v.shape

    # Lane phase: 0 -> x, 1 -> y, 2 -> z.
    phase = lax.broadcasted_iota(jnp.int32, (rb, cb), 1) % 3
    is_x = phase == 0
    is_y = phase == 1

    # Neighbour views via XLU lane rotations (positive circular shifts only):
    #   prev1[c] = v[c-1], prev2[c] = v[c-2], next1[c] = v[c+1], next2[c] = v[c+2]
    # Circular-wrap lanes are never selected below (phase masks exclude them).
    prev1 = pltpu.roll(v, shift=1, axis=1)
    prev2 = pltpu.roll(v, shift=2, axis=1)
    next1 = pltpu.roll(v, shift=cb - 1, axis=1)
    next2 = pltpu.roll(v, shift=cb - 2, axis=1)

    # Per-lane copies of the owning point's x / y / z.
    x = jnp.where(is_x, v,     jnp.where(is_y, prev1, prev2))
    y = jnp.where(is_x, next1, jnp.where(is_y, v,     prev1))
    z = jnp.where(is_x, next2, jnp.where(is_y, next1, v))

    r00, r01, r02 = rot_ref[0], rot_ref[1], rot_ref[2]
    r10, r11, r12 = rot_ref[3], rot_ref[4], rot_ref[5]
    r20, r21, r22 = rot_ref[6], rot_ref[7], rot_ref[8]

    # out component p (= lane phase) of a point:  x*R[0,p] + y*R[1,p] + z*R[2,p]
    cx = jnp.where(is_x, r00, jnp.where(is_y, r01, r02))
    cy = jnp.where(is_x, r10, jnp.where(is_y, r11, r12))
    cz = jnp.where(is_x, r20, jnp.where(is_y, r21, r22))

    # Single full-tile, lane-dense store (no sublane concat).
    out_ref[...] = (x * cx + y * cy + z * cz).astype(out_ref.dtype)


_LANE_PANEL = 384                    # lcm(3, 128): keeps lanes dense & phase-aligned
_MAX_LANE_TILE = _LANE_PANEL * 512   # 196608 lanes per tile max
_TARGET_TILE_BYTES = 6 * 1024 * 1024 # ~6 MiB real data per buffer (~512K points)


def _round_up(x, m):
    return ((x + m - 1) // m) * m


def _choose_rows(B, N):
    """Row count R for the zero-copy (R, 3*B*N/R) view of the flat xyz stream."""
    M = B * N
    if 3 * N >= _LANE_PANEL and B % 8 == 0:
        return B                      # natural (B, 3N) view is already good
    for r in (8, 16, 32, 64):         # sublane-full row count that keeps lanes wide
        if M % r == 0 and (3 * M) // r >= _LANE_PANEL:
            return r
    return B                          # fallback: natural (B, 3N) view


def _choose_blocks(R, C):
    """Block (rb, cb): cb multiple of 384 (or full row), rb multiple of 8 (or full)."""
    if C >= _LANE_PANEL:
        cb = min(_MAX_LANE_TILE, (C // _LANE_PANEL) * _LANE_PANEL)
    else:
        cb = C                        # tiny row: full width (allowed as full-dim block)
    cb_padded = _round_up(cb, 128)
    rows_budget = max(1, _TARGET_TILE_BYTES // (cb_padded * 4))
    if rows_budget >= R or R <= 8:
        rb = R
    else:
        rb = max(8, (rows_budget // 8) * 8)
    return rb, cb


@jax.jit
def rotate_module_forward(point_cloud, rot):
    """point_cloud: (B, N, 3), rot: (3, 3) -> (B, N, 3) (point_cloud @ rot)."""
    B, N, D = point_cloud.shape
    assert D == 3 and rot.shape == (3, 3)

    orig_dtype = point_cloud.dtype
    pts = point_cloud if orig_dtype == jnp.float32 else point_cloud.astype(jnp.float32)

    # Zero-copy 2-D view of the interleaved xyz stream (no transpose, no pad).
    R_rows = _choose_rows(B, N)
    C = (3 * B * N) // R_rows         # always a multiple of 3
    x2d = pts.reshape(R_rows, C)

    rb, cb = _choose_blocks(R_rows, C)
    grid = (pl.cdiv(R_rows, rb), pl.cdiv(C, cb))   # ragged edges masked by Pallas

    rot_flat = rot.astype(jnp.float32).reshape(9)  # 9 scalars -> SMEM

    out2d = pl.pallas_call(
        rotate_kernel,
        out_shape=jax.ShapeDtypeStruct((R_rows, C), jnp.float32),
        grid=grid,
        in_specs=[
            pl.BlockSpec(memory_space=pltpu.MemorySpace.SMEM),   # rotation scalars
            pl.BlockSpec((rb, cb), lambda i, j: (i, j)),         # point tile
        ],
        out_specs=pl.BlockSpec((rb, cb), lambda i, j: (i, j)),
        compiler_params=pltpu.CompilerParams(
            dimension_semantics=("parallel", "parallel"),        # v7x: 2 TCs split tiles
            vmem_limit_bytes=48 * 1024 * 1024,                   # explicit; >16 MiB v5e default
        ),
    )(rot_flat, x2d)

    out = out2d.reshape(B, N, 3)                                 # zero-copy
    return out if orig_dtype == jnp.float32 else out.astype(orig_dtype)


class RotateModule:
    """JAX/Pallas equivalent of the PyTorch RotateModule."""

    def __init__(self, angle_x, angle_y, angle_z):
        self.angle_x = angle_x
        self.angle_y = angle_y
        self.angle_z = angle_z
        # torch buffer is (1, 3, 3); broadcasting (B,N,3)@(1,3,3) == (B,N,3)@(3,3)
        self.rotation_matrix = rotation_matrix(angle_x, angle_y, angle_z)  # (3, 3)

    def __call__(self, point_cloud):
        return rotate_module_forward(point_cloud, self.rotation_matrix)


if __name__ == "__main__":
    key = jax.random.PRNGKey(0)
    B, N = 2, 128  # small shapes: batch=2, 128 points, xyz (one full 384-lane panel)
    point_cloud = jax.random.normal(key, (B, N, 3), dtype=jnp.float32)

    mod = RotateModule(angle_x=0.25 * jnp.pi, angle_y=0.5 * jnp.pi, angle_z=-0.1 * jnp.pi)
    out = jax.block_until_ready(mod(point_cloud))

    # reference check (plain JAX, mirrors torch broadcasting semantics)
    ref = point_cloud @ mod.rotation_matrix[None, :, :]
    assert out.shape == (B, N, 3)
    assert jnp.allclose(out, ref, atol=1e-5, rtol=1e-5), float(jnp.max(jnp.abs(out - ref)))

    print("KERNEL_OK")
</pallas_src>

<mosaic_0001>
module attributes {stable_mosaic.version = 11 : i64} {
  func.func @rotate_kernel(%arg0: i32, %arg1: i32, %arg2: memref<9xf32, #tpu.memory_space<smem>>, %arg3: memref<2x384xf32, #tpu.memory_space<vmem>>, %arg4: memref<2x384xf32, #tpu.memory_space<vmem>>) attributes {dimension_semantics = [#tpu.dimension_semantics<parallel>, #tpu.dimension_semantics<parallel>], iteration_bounds = array<i64: 1, 1>, scalar_prefetch = 0 : i64, scratch_operands = 0 : i64, tpu.core_type = #tpu.core_type<tc>, window_params = [{transform_indices = @transform_0, window_bounds = array<i64: 9>}, {transform_indices = @transform_1, window_bounds = array<i64: 2, 384>}, {transform_indices = @transform_2, window_bounds = array<i64: 2, 384>}]} {
    %c0 = arith.constant 0 : index
    %c0_0 = arith.constant 0 : index
    %0 = vector.load %arg3[%c0, %c0_0] : memref<2x384xf32, #tpu.memory_space<vmem>>, vector<2x384xf32>
    %1 = tpu.iota {dimensions = array<i32: 1>} : vector<2x384xi32>
    %c3_i32 = arith.constant 3 : i32
    %c0_i32 = arith.constant 0 : i32
    %2 = arith.cmpi eq, %c3_i32, %c0_i32 : i32
    %c1_i32 = arith.constant 1 : i32
    %3 = arith.select %2, %c1_i32, %c3_i32 : i32
    %4 = vector.broadcast %3 : i32 to vector<2x384xi32>
    %5 = arith.remsi %1, %4 : vector<2x384xi32>
    %c0_i32_1 = arith.constant 0 : i32
    %6 = vector.broadcast %c0_i32_1 : i32 to vector<2x384xi32>
    %7 = arith.cmpi ne, %5, %6 : vector<2x384xi32>
    %c0_i32_2 = arith.constant 0 : i32
    %8 = vector.broadcast %c0_i32_2 : i32 to vector<2x384xi32>
    %9 = arith.cmpi slt, %5, %8 : vector<2x384xi32>
    %c0_i32_3 = arith.constant 0 : i32
    %10 = arith.cmpi slt, %3, %c0_i32_3 : i32
    %11 = vector.broadcast %10 : i1 to vector<2x384xi1>
    %12 = vector.broadcast %11 : vector<2x384xi1> to vector<2x384xi1>
    %13 = arith.xori %9, %12 : vector<2x384xi1>
    %14 = arith.andi %13, %7 : vector<2x384xi1>
    %15 = vector.broadcast %3 : i32 to vector<2x384xi32>
    %16 = arith.addi %5, %15 : vector<2x384xi32>
    %17 = arith.select %14, %16, %5 : vector<2x384xi1>, vector<2x384xi32>
    %c0_i32_4 = arith.constant 0 : i32
    %18 = vector.broadcast %c0_i32_4 : i32 to vector<2x384xi32>
    %19 = arith.cmpi eq, %17, %18 : vector<2x384xi32>
    %c1_i32_5 = arith.constant 1 : i32
    %20 = vector.broadcast %c1_i32_5 : i32 to vector<2x384xi32>
    %21 = arith.cmpi eq, %17, %20 : vector<2x384xi32>
    %c1_i32_6 = arith.constant 1 : i32
    %22 = tpu.dynamic_rotate %0 by %c1_i32_6 dim 1 : vector<2x384xf32>, i32 -> vector<2x384xf32>
    %c2_i32 = arith.constant 2 : i32
    %23 = tpu.dynamic_rotate %0 by %c2_i32 dim 1 : vector<2x384xf32>, i32 -> vector<2x384xf32>
    %c383_i32 = arith.constant 383 : i32
    %24 = tpu.dynamic_rotate %0 by %c383_i32 dim 1 : vector<2x384xf32>, i32 -> vector<2x384xf32>
    %c382_i32 = arith.constant 382 : i32
    %25 = tpu.dynamic_rotate %0 by %c382_i32 dim 1 : vector<2x384xf32>, i32 -> vector<2x384xf32>
    %26 = arith.select %21, %22, %23 : vector<2x384xi1>, vector<2x384xf32>
    %27 = arith.select %19, %0, %26 : vector<2x384xi1>, vector<2x384xf32>
    %28 = arith.select %21, %0, %22 : vector<2x384xi1>, vector<2x384xf32>
    %29 = arith.select %19, %24, %28 : vector<2x384xi1>, vector<2x384xf32>
    %30 = arith.select %21, %24, %0 : vector<2x384xi1>, vector<2x384xf32>
    %31 = arith.select %19, %25, %30 : vector<2x384xi1>, vector<2x384xf32>
    %c0_7 = arith.constant 0 : index
    %32 = memref.load %arg2[%c0_7] : memref<9xf32, #tpu.memory_space<smem>>
    %c1 = arith.constant 1 : index
    %33 = memref.load %arg2[%c1] : memref<9xf32, #tpu.memory_space<smem>>
    %c2 = arith.constant 2 : index
    %34 = memref.load %arg2[%c2] : memref<9xf32, #tpu.memory_space<smem>>
    %c3 = arith.constant 3 : index
    %35 = memref.load %arg2[%c3] : memref<9xf32, #tpu.memory_space<smem>>
    %c4 = arith.constant 4 : index
    %36 = memref.load %arg2[%c4] : memref<9xf32, #tpu.memory_space<smem>>
    %c5 = arith.constant 5 : index
    %37 = memref.load %arg2[%c5] : memref<9xf32, #tpu.memory_space<smem>>
    %c6 = arith.constant 6 : index
    %38 = memref.load %arg2[%c6] : memref<9xf32, #tpu.memory_space<smem>>
    %c7 = arith.constant 7 : index
    %39 = memref.load %arg2[%c7] : memref<9xf32, #tpu.memory_space<smem>>
    %c8 = arith.constant 8 : index
    %40 = memref.load %arg2[%c8] : memref<9xf32, #tpu.memory_space<smem>>
    %41 = vector.broadcast %33 : f32 to vector<2x384xf32>
    %42 = vector.broadcast %34 : f32 to vector<2x384xf32>
    %43 = arith.select %21, %41, %42 : vector<2x384xi1>, vector<2x384xf32>
    %44 = vector.broadcast %32 : f32 to vector<2x384xf32>
    %45 = arith.select %19, %44, %43 : vector<2x384xi1>, vector<2x384xf32>
    %46 = vector.broadcast %36 : f32 to vector<2x384xf32>
    %47 = vector.broadcast %37 : f32 to vector<2x384xf32>
    %48 = arith.select %21, %46, %47 : vector<2x384xi1>, vector<2x384xf32>
    %49 = vector.broadcast %35 : f32 to vector<2x384xf32>
    %50 = arith.select %19, %49, %48 : vector<2x384xi1>, vector<2x384xf32>
    %51 = vector.broadcast %39 : f32 to vector<2x384xf32>
    %52 = vector.broadcast %40 : f32 to vector<2x384xf32>
    %53 = arith.select %21, %51, %52 : vector<2x384xi1>, vector<2x384xf32>
    %54 = vector.broadcast %38 : f32 to vector<2x384xf32>
    %55 = arith.select %19, %54, %53 : vector<2x384xi1>, vector<2x384xf32>
    %56 = arith.mulf %27, %45 : vector<2x384xf32>
    %57 = arith.mulf %29, %50 : vector<2x384xf32>
    %58 = arith.addf %56, %57 : vector<2x384xf32>
    %59 = arith.mulf %31, %55 : vector<2x384xf32>
    %60 = arith.addf %58, %59 : vector<2x384xf32>
    %c0_8 = arith.constant 0 : index
    %c0_9 = arith.constant 0 : index
    %61 = vector.load %arg4[%c0_8, %c0_9] : memref<2x384xf32, #tpu.memory_space<vmem>>, vector<2x384xf32>
    tpu.vector_store %arg4[%c0_8, %c0_9], %60 {strides = array<i32>} : memref<2x384xf32, #tpu.memory_space<vmem>>, vector<2x384xf32>,
    return
  }
  func.func @transform_0(%arg0: i32, %arg1: i32) -> i32 {
    %c0_i32 = arith.constant 0 : i32
    %c0_i32_0 = arith.constant 0 : i32
    return %c0_i32 : i32
  }
  func.func @transform_1(%arg0: i32, %arg1: i32) -> (i32, i32) {
    %c0_i32 = arith.constant 0 : i32
    return %arg0, %arg1 : i32, i32
  }
  func.func @transform_2(%arg0: i32, %arg1: i32) -> (i32, i32) {
    %c0_i32 = arith.constant 0 : i32
    return %arg0, %arg1 : i32, i32
  }
}

</mosaic_0001>

<llo_original>
// kernel: rotate_module_forward.1
$region0: #{rotate_module_forward.1}
  #allocation0 [shape = 'u32[]', space=smem, size = 0x4, offset = 0x4, fixed_abs, tag = 'smem constant byte address 0x4 - core index']
  #allocation1 [shape = 'u32[144,128]{1,0:T(1,128)}', space=vmem, size = 0x12000, scoped, tag = 'internal scratch']
  %s0 = inlined_call_operand.vmem [shape: f32[9], index: 0, kind: input, shape index: {}]
  %s1 = inlined_call_operand.vmem [shape: f32[2,384], index: 1, kind: input, shape index: {}]
  %s2 = inlined_call_operand.vmem [shape: f32[2,384], index: 2, kind: output, shape index: {}]
  %s3 = sld [smem:[#allocation0]]
  $region22: #{rotate_module_forward.1} parent=0
    _
  %s5 = ssub.s32 1, %s3
  %s6 = scalar_select 0, %s5, %s3
  $region1: #{rotate_module_forward.1} parent=0
    #allocation2 [shape = 'u8[512]{0}', space=smem, size = 0x200, scoped, tag = 'input window, operand 0, single buffered']
    #allocation3 [shape = 's32[1]{0}', space=sflag, size = 0x4, scoped, tag = 'scoped memory for rotate_module_forward.1']
    %7 = vsyncpa [#allocation3], 0
    // Predicated region
    $region2: #{rotate_module_forward.1} parent=1 // pred_check
      _
    $region3: #{rotate_module_forward.1} parent=1 // pred_check_branch
      %9 = sbr.rel (0) target = $region5
    $region4: #{rotate_module_forward.1} parent=1 // pred_region
      %s11 = ssub.s32 16, 16
      %12 = vsyncadd [#allocation3], %s11
      %s14 = sshll.u32 %s0, 4
      %s15 = int_to_ptr.vmem [resolvable:$true] %s14
      %17 = dma.vmem_to_smem %s15, 16, [#allocation2], [#allocation3]
    $region5: #{rotate_module_forward.1} parent=1 // pred_fallthru
      _
    // Predicated region
    $region6: #{rotate_module_forward.1} parent=1 // pred_check
      _
    $region7: #{rotate_module_forward.1} parent=1 // pred_check_branch
      %19 = sbr.rel (0) target = $region9
    $region8: #{rotate_module_forward.1} parent=1 // pred_region
      _
    $region9: #{rotate_module_forward.1} parent=1 // pred_fallthru
      _
    // Predicated region
    $region10: #{rotate_module_forward.1} parent=1 // pred_check
      _
    $region11: #{rotate_module_forward.1} parent=1 // pred_check_branch
      %21 = sbr.rel (0) target = $region13
    $region12: #{rotate_module_forward.1} parent=1 // pred_region
      %22 = dma.done [#allocation3], 16
    $region13: #{rotate_module_forward.1} parent=1 // pred_fallthru
      _
    %23 = sfence
    %v24 = vld [vmem:[%s1] sm:$0x3f]
    %v25 = vlaneseq
    %v26 = vand.u32 %v25, 127
    %v27 = vadd.s32 %v26, 128
    %v28 = vadd.s32 %v26, 256
    %vm29 = vcmp.lt.s32.totalorder %v26, 0
    %v30 = vsub.s32 0, %v26
    %v31 = vsel %vm29, %v30, %v26
    %v32 = vmul.u32.u64.compose %v31, 2863311531
    %v33 = vextract.low.u32 %v32
    %v34 = vextract.high.u32 %v32
    %v35 = vshrl.u32 %v34, 1
    %v36 = vmul.u32 %v35, 3
    %v37 = vsub.s32 %v31, %v36
    %v38 = vsub.s32 0, %v37
    %v39 = vsel %vm29, %v38, %v37
    %vm40 = vcmp.lt.s32.totalorder %v27, 0
    %v41 = vsub.s32 0, %v27
    %v42 = vsel %vm40, %v41, %v27
    %v43 = vmul.u32.u64.compose %v42, 2863311531
    %v44 = vextract.low.u32 %v43
    %v45 = vextract.high.u32 %v43
    %v46 = vshrl.u32 %v45, 1
    %v47 = vmul.u32 %v46, 3
    %v48 = vsub.s32 %v42, %v47
    %v49 = vsub.s32 0, %v48
    %v50 = vsel %vm40, %v49, %v48
    %vm51 = vcmp.lt.s32.totalorder %v28, 0
    %v52 = vsub.s32 0, %v28
    %v53 = vsel %vm51, %v52, %v28
    %v54 = vmul.u32.u64.compose %v53, 2863311531
    %v55 = vextract.low.u32 %v54
    %v56 = vextract.high.u32 %v54
    %v57 = vshrl.u32 %v56, 1
    %v58 = vmul.u32 %v57, 3
    %v59 = vsub.s32 %v53, %v58
    %v60 = vsub.s32 0, %v59
    %v61 = vsel %vm51, %v60, %v59
    %vm62 = vcmp.ne.s32.totalorder %v39, 0
    %vm63 = vcmp.ne.s32.totalorder %v50, 0
    %vm64 = vcmp.ne.s32.totalorder %v61, 0
    %vm65 = vcmp.lt.s32.totalorder %v39, 0
    %vm66 = vcmp.lt.s32.totalorder %v50, 0
    %vm67 = vcmp.lt.s32.totalorder %v61, 0
    %vm68 = vmand %vm65, %vm62
    %vm69 = vmand %vm66, %vm63
    %vm70 = vmand %vm67, %vm64
    %v71 = vadd.s32 %v39, 3
    %v72 = vadd.s32 %v50, 3
    %v73 = vadd.s32 %v61, 3
    %v74 = vsel %vm68, %v71, %v39
    %v75 = vsel %vm69, %v72, %v50
    %v76 = vsel %vm70, %v73, %v61
    %vm77 = vcmp.eq.s32.totalorder %v74, 0
    %vm78 = vcmp.eq.s32.totalorder %v75, 0
    %vm79 = vcmp.eq.s32.totalorder %v76, 0
    %vm80 = vcmp.eq.s32.totalorder %v74, 1
    %vm81 = vcmp.eq.s32.totalorder %v75, 1
    %vm82 = vcmp.eq.s32.totalorder %v76, 1
    %v84 = vcombine.high %v24, %v24
    %v86 = vunpack.c.l.s4 1983009808
    %v87 = vunpack.c.0.s8 %v86
    %v88 = vlaneseq
    %v89 = vshrl.u32 %v88, 7
    %v90 = vsub.s32 %v87, %v89
    %v91 = vrot.slane %v24, %v90
    %v93 = vunpack.c.l.s4 1983009808
    %v94 = vunpack.c.0.s8 %v93
    %v95 = vlaneseq
    %v96 = vshrl.u32 %v95, 7
    %v97 = vsub.s32 %v94, %v96
    %v98 = vrot.slane %v84, %v97
    %v99 = vcombine.high %v91, %v91
    %103 = vrot.lane.b32.xlu0 %v91, 1
    %v104 = vpop.permute.xlu0 %103
    %105 = vrot.lane.b32.xlu0 %v99, 1
    %v106 = vpop.permute.xlu0 %105
    %107 = vrot.lane.b32.xlu0 %v98, 1
    %v108 = vpop.permute.xlu0 %107
    %vm109 = vcmp.lt.s32.totalorder %v26, 1
    %v110 = vsel %vm109, %v106, %v108
    %v111 = vsel %vm109, %v104, %v106
    %v112 = vsel %vm109, %v108, %v104
    %113 = vrot.lane.b32.xlu0 %v91, 2
    %v114 = vpop.permute.xlu0 %113
    %115 = vrot.lane.b32.xlu0 %v99, 2
    %v116 = vpop.permute.xlu0 %115
    %117 = vrot.lane.b32.xlu0 %v98, 2
    %v118 = vpop.permute.xlu0 %117
    %vm119 = vcmp.lt.s32.totalorder %v26, 2
    %v120 = vsel %vm119, %v116, %v118
    %v121 = vsel %vm119, %v114, %v116
    %v122 = vsel %vm119, %v118, %v114
    %123 = vrot.lane.b32.xlu0 %v91, 127
    %v124 = vpop.permute.xlu0 %123
    %125 = vrot.lane.b32.xlu0 %v99, 127
    %v126 = vpop.permute.xlu0 %125
    %127 = vrot.lane.b32.xlu0 %v98, 127
    %v128 = vpop.permute.xlu0 %127
    %vm129 = vcmp.lt.s32.totalorder %v26, 127
    %v130 = vsel %vm129, %v126, %v128
    %v131 = vsel %vm129, %v124, %v126
    %v132 = vsel %vm129, %v128, %v124
    %133 = vrot.lane.b32.xlu0 %v91, 126
    %v134 = vpop.permute.xlu0 %133
    %135 = vrot.lane.b32.xlu0 %v99, 126
    %v136 = vpop.permute.xlu0 %135
    %137 = vrot.lane.b32.xlu0 %v98, 126
    %v138 = vpop.permute.xlu0 %137
    %vm139 = vcmp.lt.s32.totalorder %v26, 126
    %v140 = vsel %vm139, %v136, %v138
    %v141 = vsel %vm139, %v134, %v136
    %v142 = vsel %vm139, %v138, %v134
    %v143 = vsel %vm80, %v112, %v122
    %v144 = vsel %vm81, %v111, %v121
    %v145 = vsel %vm82, %v110, %v120
    %v146 = vsel %vm77, %v91, %v143
    %v147 = vsel %vm78, %v99, %v144
    %v148 = vsel %vm79, %v98, %v145
    %v149 = vsel %vm80, %v91, %v112
    %v150 = vsel %vm81, %v99, %v111
    %v151 = vsel %vm82, %v98, %v110
    %v152 = vsel %vm77, %v131, %v149
    %v153 = vsel %vm78, %v130, %v150
    %v154 = vsel %vm79, %v132, %v151
    %v155 = vsel %vm80, %v131, %v91
    %v156 = vsel %vm81, %v130, %v99
    %v157 = vsel %vm82, %v132, %v98
    %v158 = vsel %vm77, %v141, %v155
    %v159 = vsel %vm78, %v140, %v156
    %v160 = vsel %vm79, %v142, %v157
    %s161 = sld [smem:[#allocation2]]
    %s162 = sld [smem:[#allocation2 + $0x1]]
    %s163 = sld [smem:[#allocation2 + $0x2]]
    %s164 = sld [smem:[#allocation2 + $0x3]]
    %s165 = sld [smem:[#allocation2 + $0x4]]
    %s166 = sld [smem:[#allocation2 + $0x5]]
    %s167 = sld [smem:[#allocation2 + $0x6]]
    %s168 = sld [smem:[#allocation2 + $0x7]]
    %s169 = sld [smem:[#allocation2 + $0x8]]
    %v170 = vstv %s162
    %v171 = vstv %s163
    %v172 = vsel %vm80, %v170, %v171
    %v173 = vsel %vm81, %v170, %v171
    %v174 = vsel %vm82, %v170, %v171
    %v175 = vstv %s161
    %v176 = vsel %vm77, %v175, %v172
    %v177 = vsel %vm78, %v175, %v173
    %v178 = vsel %vm79, %v175, %v174
    %v179 = vstv %s165
    %v180 = vstv %s166
    %v181 = vsel %vm80, %v179, %v180
    %v182 = vsel %vm81, %v179, %v180
    %v183 = vsel %vm82, %v179, %v180
    %v184 = vstv %s164
    %v185 = vsel %vm77, %v184, %v181
    %v186 = vsel %vm78, %v184, %v182
    %v187 = vsel %vm79, %v184, %v183
    %v188 = vstv %s168
    %v189 = vstv %s169
    %v190 = vsel %vm80, %v188, %v189
    %v191 = vsel %vm81, %v188, %v189
    %v192 = vsel %vm82, %v188, %v189
    %v193 = vstv %s167
    %v194 = vsel %vm77, %v193, %v190
    %v195 = vsel %vm78, %v193, %v191
    %v196 = vsel %vm79, %v193, %v192
    %v197 = vmul.f32 %v146, %v176
    %v198 = vmul.f32 %v147, %v177
    %v199 = vmul.f32 %v148, %v178
    %v200 = vmul.f32 %v152, %v185
    %v201 = vmul.f32 %v153, %v186
    %v202 = vmul.f32 %v154, %v187
    %v203 = vadd.f32 %v197, %v200
    %v204 = vadd.f32 %v198, %v201
    %v205 = vadd.f32 %v199, %v202
    %v206 = vmul.f32 %v158, %v194
    %v207 = vmul.f32 %v159, %v195
    %v208 = vmul.f32 %v160, %v196
    %v209 = vadd.f32 %v203, %v206
    %v210 = vadd.f32 %v204, %v207
    %v211 = vadd.f32 %v205, %v208
    %v215 = vcombine.low %v209, %v210
    %v217 = vunpack.c.l.s4 1983009808
    %v218 = vunpack.c.0.s8 %v217
    %v219 = vlaneseq
    %v220 = vshrl.u32 %v219, 7
    %v221 = vsub.s32 %v218, %v220
    %v222 = vrot.slane %v215, %v221
    %v224 = vunpack.c.l.s4 1983009808
    %v225 = vunpack.c.0.s8 %v224
    %v226 = vlaneseq
    %v227 = vshrl.u32 %v226, 7
    %v228 = vsub.s32 %v225, %v227
    %v229 = vrot.slane %v211, %v228
    %v230 = vcombine.low %v222, %v229
    %232 = vst [vmem:[%s2] sm:$0x3f] %v230
    // Predicated region
    $region14: #{rotate_module_forward.1} parent=1 // pred_check
      _
    $region15: #{rotate_module_forward.1} parent=1 // pred_check_branch
      %234 = sbr.rel (0) target = $region17
    $region16: #{rotate_module_forward.1} parent=1 // pred_region
      _
    $region17: #{rotate_module_forward.1} parent=1 // pred_fallthru
      _
    // Predicated region
    $region18: #{rotate_module_forward.1} parent=1 // pred_check
      _
    $region19: #{rotate_module_forward.1} parent=1 // pred_check_branch
      %236 = sbr.rel (0) target = $region21
    $region20: #{rotate_module_forward.1} parent=1 // pred_region
      _
    $region21: #{rotate_module_forward.1} parent=1 // pred_fallthru
      _
    %237 = vsyncpa [#allocation3], 1

</llo_original>
